<compile_context>
chip_gen: v5e
topology: v5e:2x2
jax: 0.10.0
libtpu: 0.0.40
codegen_flags: <defaults>
</compile_context>

<pallas_src>
import functools

import jax
import jax.numpy as jnp
from jax.experimental import pallas as pl
from jax.experimental.pallas import tpu as pltpu


# ---------------------------------------------------------------------------
# tiling helper
# ---------------------------------------------------------------------------
def _pick_tile(n, target, quantum):
    """Largest tile <= target that divides n and is a multiple of quantum.

    Falls back to the full extent (no tiling along that axis) when no such
    tile exists — always correct, just uses more VMEM.
    """
    if n <= target:
        return n
    t = (min(target, n) // quantum) * quantum
    while t >= quantum:
        if n % t == 0:
            return t
        t -= quantum
    return n


# ---------------------------------------------------------------------------
# K0: shared feature transform  fts = [s1 @ W_fc^T | s2 @ W_fc^T]   (N, 2*n_h)
#     (computed once; reused by all four GCN applications)
# ---------------------------------------------------------------------------
def _fts_kernel(s1_ref, s2_ref, w_ref, fts_ref):
    w = w_ref[...]
    f1 = jnp.dot(s1_ref[...], w, preferred_element_type=jnp.float32)
    f2 = jnp.dot(s2_ref[...], w, preferred_element_type=jnp.float32)
    fts_ref[...] = jnp.concatenate([f1, f2], axis=1)


def feature_transform(s1, s2, w_t, tm):
    N, n_in = s1.shape
    n_h = w_t.shape[1]
    return pl.pallas_call(
        _fts_kernel,
        out_shape=jax.ShapeDtypeStruct((N, 2 * n_h), jnp.float32),
        grid=(N // tm,),
        in_specs=[
            pl.BlockSpec((tm, n_in), lambda i: (i, 0)),
            pl.BlockSpec((tm, n_in), lambda i: (i, 0)),
            pl.BlockSpec((n_in, n_h), lambda i: (0, 0)),
        ],
        out_specs=pl.BlockSpec((tm, 2 * n_h), lambda i: (i, 0)),
        compiler_params=pltpu.CompilerParams(dimension_semantics=("parallel",)),
    )(s1, s2, w_t)


# ---------------------------------------------------------------------------
# K1: fused GCN stage + folded AvgReadout numerators
#   h02      = prelu(adj  @ [fts1 | fts2] + [b | b])          -> (N, 2*n_h)
#   colsum13 = [ sum_rows prelu(aug1 @ fts1 + b) |
#                sum_rows prelu(aug2 @ fts1 + b) ]            -> (1, 2*n_h)
# grid = (row tiles, k tiles); k is the contraction (reduction axis last).
# ---------------------------------------------------------------------------
def _gcn_readout_kernel(n_h,
                        adj_ref, a1_ref, a2_ref, fts_ref, b_ref, alpha_ref,
                        h02_ref, colsum_ref,
                        acc02, acc1, acc3, cs_scr):
    i = pl.program_id(0)
    k = pl.program_id(1)
    n_i = pl.num_programs(0)
    n_k = pl.num_programs(1)

    @pl.when(k == 0)
    def _():
        acc02[...] = jnp.zeros_like(acc02)
        acc1[...] = jnp.zeros_like(acc1)
        acc3[...] = jnp.zeros_like(acc3)

    @pl.when((i == 0) & (k == 0))
    def _():
        cs_scr[...] = jnp.zeros_like(cs_scr)

    fts = fts_ref[...]                    # (tk, 2*n_h) = [s1@W | s2@W]
    fts1 = fts[:, :n_h]                   # (tk, n_h)
    acc02[...] += jnp.dot(adj_ref[...], fts, preferred_element_type=jnp.float32)
    acc1[...] += jnp.dot(a1_ref[...], fts1, preferred_element_type=jnp.float32)
    acc3[...] += jnp.dot(a2_ref[...], fts1, preferred_element_type=jnp.float32)

    @pl.when(k == n_k - 1)
    def _():
        b = b_ref[...]                               # (1, n_h)
        b2 = jnp.concatenate([b, b], axis=1)         # (1, 2*n_h)
        alpha = alpha_ref[0]

        def prelu(x):
            return jnp.where(x > 0, x, alpha * x)

        h02 = prelu(acc02[...] + b2)                 # [h_0 | h_2] row tile
        h1 = prelu(acc1[...] + b)
        h3 = prelu(acc3[...] + b)
        h02_ref[...] = h02
        cs_scr[...] += jnp.concatenate(
            [jnp.sum(h1, axis=0, keepdims=True),
             jnp.sum(h3, axis=0, keepdims=True)], axis=1)

    @pl.when((i == n_i - 1) & (k == n_k - 1))
    def _():
        colsum_ref[...] = cs_scr[...]


def gcn_readout(adj, aug1, aug2, fts, bias, alpha, tm, tk, n_h):
    N = adj.shape[0]
    kernel = functools.partial(_gcn_readout_kernel, n_h)
    return pl.pallas_call(
        kernel,
        out_shape=(jax.ShapeDtypeStruct((N, 2 * n_h), jnp.float32),
                   jax.ShapeDtypeStruct((1, 2 * n_h), jnp.float32)),
        grid=(N // tm, N // tk),
        in_specs=[
            pl.BlockSpec((tm, tk), lambda i, k: (i, k)),
            pl.BlockSpec((tm, tk), lambda i, k: (i, k)),
            pl.BlockSpec((tm, tk), lambda i, k: (i, k)),
            pl.BlockSpec((tk, 2 * n_h), lambda i, k: (k, 0)),
            pl.BlockSpec((1, n_h), lambda i, k: (0, 0)),
            pl.BlockSpec(memory_space=pltpu.MemorySpace.SMEM),
        ],
        out_specs=(
            pl.BlockSpec((tm, 2 * n_h), lambda i, k: (i, 0)),
            pl.BlockSpec((1, 2 * n_h), lambda i, k: (0, 0)),
        ),
        scratch_shapes=[
            pltpu.VMEM((tm, 2 * n_h), jnp.float32),   # acc for [h_0 | h_2]
            pltpu.VMEM((tm, n_h), jnp.float32),       # acc for h_1
            pltpu.VMEM((tm, n_h), jnp.float32),       # acc for h_3
            pltpu.VMEM((1, 2 * n_h), jnp.float32),    # readout column sums
        ],
        # Row axis is "arbitrary" (not "parallel") because the readout column
        # sums are accumulated across row tiles in persistent VMEM scratch.
        compiler_params=pltpu.CompilerParams(
            dimension_semantics=("arbitrary", "arbitrary")),
    )(adj, aug1, aug2, fts, bias, alpha)


# ---------------------------------------------------------------------------
# K2: readout finalize + merged discriminator, lane-dense (2, N) output.
#   c = sigmoid(colsum_1 / N) + sigmoid(colsum_3 / N)
#   v = W_bil @ c^T
#   row 0 = h_0 @ v + 2*b   (sc_1 of ret1+ret2)
#   row 1 = h_2 @ v + 2*b   (sc_2 of ret1+ret2)
# ---------------------------------------------------------------------------
def _disc_kernel(n_h, inv_n, colsum_ref, w_ref, b_ref, h02_ref, out_ref):
    cs = colsum_ref[...]                                   # (1, 2*n_h)
    c = (jax.nn.sigmoid(cs[:, :n_h] * inv_n)
         + jax.nn.sigmoid(cs[:, n_h:] * inv_n))            # c_1 + c_3, (1, n_h)
    # v as a row vector: v[i] = sum_j W_bil[i, j] * c[j]
    v = jax.lax.dot_general(c, w_ref[...], (((1,), (1,)), ((), ())),
                            preferred_element_type=jnp.float32)      # (1, n_h)
    h02 = h02_ref[...]                                     # (tb, 2*n_h)
    sc1 = jax.lax.dot_general(v, h02[:, :n_h], (((1,), (1,)), ((), ())),
                              preferred_element_type=jnp.float32)    # (1, tb)
    sc2 = jax.lax.dot_general(v, h02[:, n_h:], (((1,), (1,)), ((), ())),
                              preferred_element_type=jnp.float32)    # (1, tb)
    out_ref[...] = jnp.concatenate([sc1, sc2], axis=0) + 2.0 * b_ref[0]


def discriminator(colsum, w_bil, b_bil, h02, n_h, N, tb):
    kernel = functools.partial(_disc_kernel, n_h, 1.0 / N)
    return pl.pallas_call(
        kernel,
        out_shape=jax.ShapeDtypeStruct((2, N), jnp.float32),
        grid=(N // tb,),
        in_specs=[
            pl.BlockSpec((1, 2 * n_h), lambda i: (0, 0)),
            pl.BlockSpec((n_h, n_h), lambda i: (0, 0)),
            pl.BlockSpec(memory_space=pltpu.MemorySpace.SMEM),
            pl.BlockSpec((tb, 2 * n_h), lambda i: (i, 0)),
        ],
        out_specs=pl.BlockSpec((2, tb), lambda i: (0, i)),
        compiler_params=pltpu.CompilerParams(dimension_semantics=("parallel",)),
    )(colsum, w_bil, b_bil, h02)


# ---------------------------------------------------------------------------
# Parameters (deterministic, synthetic — mirrors module __init__ shapes)
# ---------------------------------------------------------------------------
def init_params(key, n_in, n_h):
    k1, k2 = jax.random.split(key)
    # nn.Linear(n_in, n_h, bias=False): weight (n_h, n_in), xavier_uniform
    bound_fc = (6.0 / (n_in + n_h)) ** 0.5
    w_fc = jax.random.uniform(k1, (n_h, n_in), jnp.float32, -bound_fc, bound_fc)
    # nn.Bilinear(n_h, n_h, 1): weight (1, n_h, n_h), xavier_uniform; bias zero
    bound_bil = (6.0 / (n_h * n_h + n_h)) ** 0.5
    w_bil = jax.random.uniform(k2, (n_h, n_h), jnp.float32, -bound_bil, bound_bil)
    return {
        "w_fc_t": w_fc.T,                            # (n_in, n_h): seq @ W^T
        "b_gcn": jnp.zeros((n_h,), jnp.float32),     # GCN bias, filled with 0
        "alpha": jnp.array([0.25], jnp.float32),     # PReLU slope (default init)
        "w_bil": w_bil,                              # (n_h, n_h)
        "b_bil": jnp.array([0.0], jnp.float32),      # Bilinear bias, filled 0
    }


# ---------------------------------------------------------------------------
# DGI forward
# ---------------------------------------------------------------------------
def dgi_forward(params, seq1, seq2, adj, aug_adj1, aug_adj2):
    s1 = seq1[0]     # squeeze PyTorch batch dim of 1 -> (N, n_in)
    s2 = seq2[0]
    N = s1.shape[0]
    n_h = params["w_fc_t"].shape[1]

    tm = _pick_tile(N, 256, 8)      # adj row tile (sublane axis)
    tk = _pick_tile(N, 512, 128)    # adj contraction tile (lane axis)
    tb = _pick_tile(N, 512, 128)    # discriminator row tile (lane of output)

    bias = params["b_gcn"].reshape(1, n_h)
    fts = feature_transform(s1, s2, params["w_fc_t"], tm)           # (N, 2*n_h)
    h02, colsum = gcn_readout(adj, aug_adj1, aug_adj2, fts, bias,
                              params["alpha"], tm, tk, n_h)
    scores_t = discriminator(colsum, params["w_bil"], params["b_bil"],
                             h02, n_h, N, tb)                        # (2, N)
    # torch.cat((sc_1, sc_2), dim=1) of ret1+ret2: (1, 2N) = [sc1..., sc2...]
    return scores_t.reshape(1, 2 * N)


# ---------------------------------------------------------------------------
# Pure-JAX reference (mirrors the PyTorch module exactly)
# ---------------------------------------------------------------------------
def _reference_forward(params, seq1, seq2, adj, aug_adj1, aug_adj2):
    s1, s2 = seq1[0], seq2[0]
    w_t, b = params["w_fc_t"], params["b_gcn"]
    alpha = params["alpha"][0]
    w_bil, b_bil = params["w_bil"], params["b_bil"][0]

    def gcn(s, a):
        out = a @ (s @ w_t) + b
        return jnp.where(out > 0, out, alpha * out)

    h_0 = gcn(s1, adj)
    h_1 = gcn(s1, aug_adj1)
    h_3 = gcn(s1, aug_adj2)
    h_2 = gcn(s2, adj)
    c_1 = jax.nn.sigmoid(jnp.mean(h_1, axis=0))
    c_3 = jax.nn.sigmoid(jnp.mean(h_3, axis=0))

    def disc(c):
        sc1 = h_0 @ w_bil @ c + b_bil
        sc2 = h_2 @ w_bil @ c + b_bil
        return jnp.concatenate([sc1, sc2])[None, :]

    return disc(c_1) + disc(c_3)


if __name__ == "__main__":
    N, n_in, n_h = 16, 32, 32
    key = jax.random.PRNGKey(0)
    ks = jax.random.split(key, 6)
    params = init_params(ks[0], n_in, n_h)

    seq1 = jax.random.normal(ks[1], (1, N, n_in), jnp.float32)
    seq2 = jax.random.normal(ks[2], (1, N, n_in), jnp.float32)
    adj = jax.random.uniform(ks[3], (N, N), jnp.float32)
    aug_adj1 = jax.random.uniform(ks[4], (N, N), jnp.float32)
    aug_adj2 = jax.random.uniform(ks[5], (N, N), jnp.float32)

    ret = jax.jit(dgi_forward)(params, seq1, seq2, adj, aug_adj1, aug_adj2)
    jax.block_until_ready(ret)
    assert ret.shape == (1, 2 * N) and ret.dtype == jnp.float32

    ref = _reference_forward(params, seq1, seq2, adj, aug_adj1, aug_adj2)
    assert jnp.allclose(ret, ref, rtol=1e-3, atol=1e-3), float(
        jnp.max(jnp.abs(ret - ref)))
    print("KERNEL_OK")
</pallas_src>

<mosaic_0001>
module attributes {stable_mosaic.version = 11 : i64} {
  func.func @_gcn_readout_kernel(%arg0: i32, %arg1: i32, %arg2: memref<16x16xf32, #tpu.memory_space<vmem>>, %arg3: memref<16x16xf32, #tpu.memory_space<vmem>>, %arg4: memref<16x16xf32, #tpu.memory_space<vmem>>, %arg5: memref<16x64xf32, #tpu.memory_space<vmem>>, %arg6: memref<1x32xf32, #tpu.memory_space<vmem>>, %arg7: memref<1xf32, #tpu.memory_space<smem>>, %arg8: memref<16x64xf32, #tpu.memory_space<vmem>>, %arg9: memref<1x64xf32, #tpu.memory_space<vmem>>, %arg10: memref<16x64xf32, #tpu.memory_space<vmem>>, %arg11: memref<16x32xf32, #tpu.memory_space<vmem>>, %arg12: memref<16x32xf32, #tpu.memory_space<vmem>>, %arg13: memref<1x64xf32, #tpu.memory_space<vmem>>) attributes {dimension_semantics = [#tpu.dimension_semantics<arbitrary>, #tpu.dimension_semantics<arbitrary>], iteration_bounds = array<i64: 1, 1>, scalar_prefetch = 0 : i64, scratch_operands = 4 : i64, tpu.core_type = #tpu.core_type<tc>, window_params = [{transform_indices = @transform_0, window_bounds = array<i64: 16, 16>}, {transform_indices = @transform_1, window_bounds = array<i64: 16, 16>}, {transform_indices = @transform_2, window_bounds = array<i64: 16, 16>}, {transform_indices = @transform_3, window_bounds = array<i64: 16, 64>}, {pipeline_mode = #tpu.pipeline_mode<synchronous>, transform_indices = @transform_4, window_bounds = array<i64: 1, 32>}, {transform_indices = @transform_5, window_bounds = array<i64: 1>}, {transform_indices = @transform_6, window_bounds = array<i64: 16, 64>}, {pipeline_mode = #tpu.pipeline_mode<synchronous>, transform_indices = @transform_7, window_bounds = array<i64: 1, 64>}]} {
    %c0_i32 = arith.constant 0 : i32
    %0 = arith.cmpi eq, %arg1, %c0_i32 : i32
    %1 = arith.extui %0 : i1 to i32
    %c0_i32_0 = arith.constant 0 : i32
    %2 = arith.cmpi ne, %1, %c0_i32_0 : i32
    scf.if %2 {
      %cst_30 = arith.constant 0.000000e+00 : f32
      %33 = vector.broadcast %cst_30 : f32 to vector<16x64xf32>
      %c0_31 = arith.constant 0 : index
      %c0_32 = arith.constant 0 : index
      %34 = vector.load %arg10[%c0_31, %c0_32] : memref<16x64xf32, #tpu.memory_space<vmem>>, vector<16x64xf32>
      tpu.vector_store %arg10[%c0_31, %c0_32], %33 {strides = array<i32>} : memref<16x64xf32, #tpu.memory_space<vmem>>, vector<16x64xf32>,
      %cst_33 = arith.constant 0.000000e+00 : f32
      %35 = vector.broadcast %cst_33 : f32 to vector<16x32xf32>
      %c0_34 = arith.constant 0 : index
      %c0_35 = arith.constant 0 : index
      %36 = vector.load %arg11[%c0_34, %c0_35] : memref<16x32xf32, #tpu.memory_space<vmem>>, vector<16x32xf32>
      tpu.vector_store %arg11[%c0_34, %c0_35], %35 {strides = array<i32>} : memref<16x32xf32, #tpu.memory_space<vmem>>, vector<16x32xf32>,
      %cst_36 = arith.constant 0.000000e+00 : f32
      %37 = vector.broadcast %cst_36 : f32 to vector<16x32xf32>
      %c0_37 = arith.constant 0 : index
      %c0_38 = arith.constant 0 : index
      %38 = vector.load %arg12[%c0_37, %c0_38] : memref<16x32xf32, #tpu.memory_space<vmem>>, vector<16x32xf32>
      tpu.vector_store %arg12[%c0_37, %c0_38], %37 {strides = array<i32>} : memref<16x32xf32, #tpu.memory_space<vmem>>, vector<16x32xf32>,
    } else {
    }
    %c0_i32_1 = arith.constant 0 : i32
    %3 = arith.cmpi eq, %arg0, %c0_i32_1 : i32
    %c0_i32_2 = arith.constant 0 : i32
    %4 = arith.cmpi eq, %arg1, %c0_i32_2 : i32
    %5 = arith.andi %3, %4 : i1
    %6 = arith.extui %5 : i1 to i32
    %c0_i32_3 = arith.constant 0 : i32
    %7 = arith.cmpi ne, %6, %c0_i32_3 : i32
    scf.if %7 {
      %cst_30 = arith.constant 0.000000e+00 : f32
      %33 = vector.broadcast %cst_30 : f32 to vector<1x64xf32>
      %c0_31 = arith.constant 0 : index
      %c0_32 = arith.constant 0 : index
      %34 = vector.load %arg13[%c0_31, %c0_32] : memref<1x64xf32, #tpu.memory_space<vmem>>, vector<1x64xf32>
      tpu.vector_store %arg13[%c0_31, %c0_32], %33 {strides = array<i32>} : memref<1x64xf32, #tpu.memory_space<vmem>>, vector<1x64xf32>,
    } else {
    }
    %c0 = arith.constant 0 : index
    %c0_4 = arith.constant 0 : index
    %8 = vector.load %arg5[%c0, %c0_4] : memref<16x64xf32, #tpu.memory_space<vmem>>, vector<16x64xf32>
    %9 = vector.extract_strided_slice %8 {offsets = [0, 0], sizes = [16, 32], strides = [1, 1]} : vector<16x64xf32> to vector<16x32xf32>
    %c0_5 = arith.constant 0 : index
    %c0_6 = arith.constant 0 : index
    %10 = vector.load %arg10[%c0_5, %c0_6] : memref<16x64xf32, #tpu.memory_space<vmem>>, vector<16x64xf32>
    %c0_7 = arith.constant 0 : index
    %c0_8 = arith.constant 0 : index
    %11 = vector.load %arg2[%c0_7, %c0_8] : memref<16x16xf32, #tpu.memory_space<vmem>>, vector<16x16xf32>
    %cst = arith.constant dense<0.000000e+00> : vector<16x64xf32>
    %12 = tpu.matmul %11, %8, %cst {dimension_numbers = #tpu.dot_dimension_numbers<[1], [0], [0], [1], [0, 0, 1, 1], [], []>} : vector<16x16xf32>, vector<16x64xf32>, vector<16x64xf32> -> vector<16x64xf32>
    %13 = arith.addf %10, %12 : vector<16x64xf32>
    %c0_9 = arith.constant 0 : index
    %c0_10 = arith.constant 0 : index
    %14 = vector.load %arg10[%c0_9, %c0_10] : memref<16x64xf32, #tpu.memory_space<vmem>>, vector<16x64xf32>
    tpu.vector_store %arg10[%c0_9, %c0_10], %13 {strides = array<i32>} : memref<16x64xf32, #tpu.memory_space<vmem>>, vector<16x64xf32>,
    %c0_11 = arith.constant 0 : index
    %c0_12 = arith.constant 0 : index
    %15 = vector.load %arg11[%c0_11, %c0_12] : memref<16x32xf32, #tpu.memory_space<vmem>>, vector<16x32xf32>
    %c0_13 = arith.constant 0 : index
    %c0_14 = arith.constant 0 : index
    %16 = vector.load %arg3[%c0_13, %c0_14] : memref<16x16xf32, #tpu.memory_space<vmem>>, vector<16x16xf32>
    %cst_15 = arith.constant dense<0.000000e+00> : vector<16x32xf32>
    %17 = tpu.matmul %16, %9, %cst_15 {dimension_numbers = #tpu.dot_dimension_numbers<[1], [0], [0], [1], [0, 0, 1, 1], [], []>} : vector<16x16xf32>, vector<16x32xf32>, vector<16x32xf32> -> vector<16x32xf32>
    %18 = arith.addf %15, %17 : vector<16x32xf32>
    %c0_16 = arith.constant 0 : index
    %c0_17 = arith.constant 0 : index
    %19 = vector.load %arg11[%c0_16, %c0_17] : memref<16x32xf32, #tpu.memory_space<vmem>>, vector<16x32xf32>
    tpu.vector_store %arg11[%c0_16, %c0_17], %18 {strides = array<i32>} : memref<16x32xf32, #tpu.memory_space<vmem>>, vector<16x32xf32>,
    %c0_18 = arith.constant 0 : index
    %c0_19 = arith.constant 0 : index
    %20 = vector.load %arg12[%c0_18, %c0_19] : memref<16x32xf32, #tpu.memory_space<vmem>>, vector<16x32xf32>
    %c0_20 = arith.constant 0 : index
    %c0_21 = arith.constant 0 : index
    %21 = vector.load %arg4[%c0_20, %c0_21] : memref<16x16xf32, #tpu.memory_space<vmem>>, vector<16x16xf32>
    %cst_22 = arith.constant dense<0.000000e+00> : vector<16x32xf32>
    %22 = tpu.matmul %21, %9, %cst_22 {dimension_numbers = #tpu.dot_dimension_numbers<[1], [0], [0], [1], [0, 0, 1, 1], [], []>} : vector<16x16xf32>, vector<16x32xf32>, vector<16x32xf32> -> vector<16x32xf32>
    %23 = arith.addf %20, %22 : vector<16x32xf32>
    %c0_23 = arith.constant 0 : index
    %c0_24 = arith.constant 0 : index
    %24 = vector.load %arg12[%c0_23, %c0_24] : memref<16x32xf32, #tpu.memory_space<vmem>>, vector<16x32xf32>
    tpu.vector_store %arg12[%c0_23, %c0_24], %23 {strides = array<i32>} : memref<16x32xf32, #tpu.memory_space<vmem>>, vector<16x32xf32>,
    %c0_i32_25 = arith.constant 0 : i32
    %25 = arith.cmpi eq, %arg1, %c0_i32_25 : i32
    %26 = arith.extui %25 : i1 to i32
    %c0_i32_26 = arith.constant 0 : i32
    %27 = arith.cmpi ne, %26, %c0_i32_26 : i32
    scf.if %27 {
      %c0_30 = arith.constant 0 : index
      %c0_31 = arith.constant 0 : index
      %33 = vector.load %arg6[%c0_30, %c0_31] : memref<1x32xf32, #tpu.memory_space<vmem>>, vector<1x32xf32>
      %34 = tpu.concatenate %33, %33 in 1 : vector<1x32xf32>, vector<1x32xf32> -> vector<1x64xf32>
      %c0_32 = arith.constant 0 : index
      %35 = memref.load %arg7[%c0_32] : memref<1xf32, #tpu.memory_space<smem>>
      %c0_33 = arith.constant 0 : index
      %c0_34 = arith.constant 0 : index
      %36 = vector.load %arg10[%c0_33, %c0_34] : memref<16x64xf32, #tpu.memory_space<vmem>>, vector<16x64xf32>
      %37 = vector.broadcast %34 : vector<1x64xf32> to vector<16x64xf32>
      %38 = arith.addf %36, %37 : vector<16x64xf32>
      %cst_35 = arith.constant 0.000000e+00 : f32
      %39 = vector.broadcast %cst_35 : f32 to vector<16x64xf32>
      %40 = arith.cmpf ogt, %38, %39 : vector<16x64xf32>
      %41 = vector.broadcast %35 : f32 to vector<16x64xf32>
      %42 = arith.mulf %41, %38 : vector<16x64xf32>
      %43 = arith.select %40, %38, %42 : vector<16x64xi1>, vector<16x64xf32>
      %c0_36 = arith.constant 0 : index
      %c0_37 = arith.constant 0 : index
      %44 = vector.load %arg11[%c0_36, %c0_37] : memref<16x32xf32, #tpu.memory_space<vmem>>, vector<16x32xf32>
      %45 = vector.broadcast %33 : vector<1x32xf32> to vector<16x32xf32>
      %46 = arith.addf %44, %45 : vector<16x32xf32>
      %cst_38 = arith.constant 0.000000e+00 : f32
      %47 = vector.broadcast %cst_38 : f32 to vector<16x32xf32>
      %48 = arith.cmpf ogt, %46, %47 : vector<16x32xf32>
      %49 = vector.broadcast %35 : f32 to vector<16x32xf32>
      %50 = arith.mulf %49, %46 : vector<16x32xf32>
      %51 = arith.select %48, %46, %50 : vector<16x32xi1>, vector<16x32xf32>
      %c0_39 = arith.constant 0 : index
      %c0_40 = arith.constant 0 : index
      %52 = vector.load %arg12[%c0_39, %c0_40] : memref<16x32xf32, #tpu.memory_space<vmem>>, vector<16x32xf32>
      %53 = vector.broadcast %33 : vector<1x32xf32> to vector<16x32xf32>
      %54 = arith.addf %52, %53 : vector<16x32xf32>
      %cst_41 = arith.constant 0.000000e+00 : f32
      %55 = vector.broadcast %cst_41 : f32 to vector<16x32xf32>
      %56 = arith.cmpf ogt, %54, %55 : vector<16x32xf32>
      %57 = vector.broadcast %35 : f32 to vector<16x32xf32>
      %58 = arith.mulf %57, %54 : vector<16x32xf32>
      %59 = arith.select %56, %54, %58 : vector<16x32xi1>, vector<16x32xf32>
      %c0_42 = arith.constant 0 : index
      %c0_43 = arith.constant 0 : index
      %60 = vector.load %arg8[%c0_42, %c0_43] : memref<16x64xf32, #tpu.memory_space<vmem>>, vector<16x64xf32>
      tpu.vector_store %arg8[%c0_42, %c0_43], %43 {strides = array<i32>} : memref<16x64xf32, #tpu.memory_space<vmem>>, vector<16x64xf32>,
      %c0_44 = arith.constant 0 : index
      %c0_45 = arith.constant 0 : index
      %61 = vector.load %arg13[%c0_44, %c0_45] : memref<1x64xf32, #tpu.memory_space<vmem>>, vector<1x64xf32>
      %cst_46 = arith.constant dense<0.000000e+00> : vector<32xf32>
      %62 = vector.multi_reduction <add>, %51, %cst_46 [0] : vector<16x32xf32> to vector<32xf32>
      %63 = vector.shape_cast %62 : vector<32xf32> to vector<1x32xf32>
      %cst_47 = arith.constant dense<0.000000e+00> : vector<32xf32>
      %64 = vector.multi_reduction <add>, %59, %cst_47 [0] : vector<16x32xf32> to vector<32xf32>
      %65 = vector.shape_cast %64 : vector<32xf32> to vector<1x32xf32>
      %66 = tpu.concatenate %63, %65 in 1 : vector<1x32xf32>, vector<1x32xf32> -> vector<1x64xf32>
      %67 = arith.addf %61, %66 : vector<1x64xf32>
      %c0_48 = arith.constant 0 : index
      %c0_49 = arith.constant 0 : index
      %68 = vector.load %arg13[%c0_48, %c0_49] : memref<1x64xf32, #tpu.memory_space<vmem>>, vector<1x64xf32>
      tpu.vector_store %arg13[%c0_48, %c0_49], %67 {strides = array<i32>} : memref<1x64xf32, #tpu.memory_space<vmem>>, vector<1x64xf32>,
    } else {
    }
    %c0_i32_27 = arith.constant 0 : i32
    %28 = arith.cmpi eq, %arg0, %c0_i32_27 : i32
    %c0_i32_28 = arith.constant 0 : i32
    %29 = arith.cmpi eq, %arg1, %c0_i32_28 : i32
    %30 = arith.andi %28, %29 : i1
    %31 = arith.extui %30 : i1 to i32
    %c0_i32_29 = arith.constant 0 : i32
    %32 = arith.cmpi ne, %31, %c0_i32_29 : i32
    scf.if %32 {
      %c0_30 = arith.constant 0 : index
      %c0_31 = arith.constant 0 : index
      %33 = vector.load %arg13[%c0_30, %c0_31] : memref<1x64xf32, #tpu.memory_space<vmem>>, vector<1x64xf32>
      %c0_32 = arith.constant 0 : index
      %c0_33 = arith.constant 0 : index
      %34 = vector.load %arg9[%c0_32, %c0_33] : memref<1x64xf32, #tpu.memory_space<vmem>>, vector<1x64xf32>
      tpu.vector_store %arg9[%c0_32, %c0_33], %33 {strides = array<i32>} : memref<1x64xf32, #tpu.memory_space<vmem>>, vector<1x64xf32>,
    } else {
    }
    return
  }
  func.func @transform_0(%arg0: i32, %arg1: i32) -> (i32, i32) {
    %c0_i32 = arith.constant 0 : i32
    return %arg0, %arg1 : i32, i32
  }
  func.func @transform_1(%arg0: i32, %arg1: i32) -> (i32, i32) {
    %c0_i32 = arith.constant 0 : i32
    return %arg0, %arg1 : i32, i32
  }
  func.func @transform_2(%arg0: i32, %arg1: i32) -> (i32, i32) {
    %c0_i32 = arith.constant 0 : i32
    return %arg0, %arg1 : i32, i32
  }
  func.func @transform_3(%arg0: i32, %arg1: i32) -> (i32, i32) {
    %c0_i32 = arith.constant 0 : i32
    %c0_i32_0 = arith.constant 0 : i32
    return %arg1, %c0_i32 : i32, i32
  }
  func.func @transform_4(%arg0: i32, %arg1: i32) -> (i32, i32) {
    %c0_i32 = arith.constant 0 : i32
    %c0_i32_0 = arith.constant 0 : i32
    %c0_i32_1 = arith.constant 0 : i32
    return %c0_i32, %c0_i32_0 : i32, i32
  }
  func.func @transform_5(%arg0: i32, %arg1: i32) -> i32 {
    %c0_i32 = arith.constant 0 : i32
    %c0_i32_0 = arith.constant 0 : i32
    return %c0_i32 : i32
  }
  func.func @transform_6(%arg0: i32, %arg1: i32) -> (i32, i32) {
    %c0_i32 = arith.constant 0 : i32
    %c0_i32_0 = arith.constant 0 : i32
    return %arg0, %c0_i32 : i32, i32
  }
  func.func @transform_7(%arg0: i32, %arg1: i32) -> (i32, i32) {
    %c0_i32 = arith.constant 0 : i32
    %c0_i32_0 = arith.constant 0 : i32
    %c0_i32_1 = arith.constant 0 : i32
    return %c0_i32, %c0_i32_0 : i32, i32
  }
}

module attributes {stable_mosaic.version = 11 : i64} {
  func.func @_disc_kernel(%arg0: i32, %arg1: memref<1x64xf32, #tpu.memory_space<vmem>>, %arg2: memref<32x32xf32, #tpu.memory_space<vmem>>, %arg3: memref<1xf32, #tpu.memory_space<smem>>, %arg4: memref<16x64xf32, #tpu.memory_space<vmem>>, %arg5: memref<2x16xf32, #tpu.memory_space<vmem>>) attributes {dimension_semantics = [#tpu.dimension_semantics<parallel>], iteration_bounds = array<i64: 1>, scalar_prefetch = 0 : i64, scratch_operands = 0 : i64, tpu.core_type = #tpu.core_type<tc>, window_params = [{pipeline_mode = #tpu.pipeline_mode<synchronous>, transform_indices = @transform_0, window_bounds = array<i64: 1, 64>}, {pipeline_mode = #tpu.pipeline_mode<synchronous>, transform_indices = @transform_1, window_bounds = array<i64: 32, 32>}, {transform_indices = @transform_2, window_bounds = array<i64: 1>}, {transform_indices = @transform_3, window_bounds = array<i64: 16, 64>}, {transform_indices = @transform_4, window_bounds = array<i64: 2, 16>}]} {
    %c0 = arith.constant 0 : index
    %c0_0 = arith.constant 0 : index
    %0 = vector.load %arg1[%c0, %c0_0] : memref<1x64xf32, #tpu.memory_space<vmem>>, vector<1x64xf32>
    %1 = vector.extract_strided_slice %0 {offsets = [0, 0], sizes = [1, 32], strides = [1, 1]} : vector<1x64xf32> to vector<1x32xf32>
    %cst = arith.constant 6.250000e-02 : f32
    %2 = vector.broadcast %cst : f32 to vector<1x32xf32>
    %3 = arith.mulf %1, %2 : vector<1x32xf32>
    %4 = arith.negf %3 : vector<1x32xf32>
    %5 = math.exp %4 : vector<1x32xf32>
    %cst_1 = arith.constant 1.000000e+00 : f32
    %6 = vector.broadcast %cst_1 : f32 to vector<1x32xf32>
    %7 = arith.addf %6, %5 : vector<1x32xf32>
    %8 = arith.divf %6, %7 : vector<1x32xf32>
    %9 = vector.extract_strided_slice %0 {offsets = [0, 32], sizes = [1, 32], strides = [1, 1]} : vector<1x64xf32> to vector<1x32xf32>
    %cst_2 = arith.constant 6.250000e-02 : f32
    %10 = vector.broadcast %cst_2 : f32 to vector<1x32xf32>
    %11 = arith.mulf %9, %10 : vector<1x32xf32>
    %12 = arith.negf %11 : vector<1x32xf32>
    %13 = math.exp %12 : vector<1x32xf32>
    %cst_3 = arith.constant 1.000000e+00 : f32
    %14 = vector.broadcast %cst_3 : f32 to vector<1x32xf32>
    %15 = arith.addf %14, %13 : vector<1x32xf32>
    %16 = arith.divf %14, %15 : vector<1x32xf32>
    %17 = arith.addf %8, %16 : vector<1x32xf32>
    %c0_4 = arith.constant 0 : index
    %c0_5 = arith.constant 0 : index
    %18 = vector.load %arg2[%c0_4, %c0_5] : memref<32x32xf32, #tpu.memory_space<vmem>>, vector<32x32xf32>
    %cst_6 = arith.constant dense<0.000000e+00> : vector<1x32xf32>
    %19 = tpu.matmul %17, %18, %cst_6 {dimension_numbers = #tpu.dot_dimension_numbers<[1], [1], [0], [0], [0, 0, 1, 0], [], []>} : vector<1x32xf32>, vector<32x32xf32>, vector<1x32xf32> -> vector<1x32xf32>
    %c0_7 = arith.constant 0 : index
    %c0_8 = arith.constant 0 : index
    %20 = vector.load %arg4[%c0_7, %c0_8] : memref<16x64xf32, #tpu.memory_space<vmem>>, vector<16x64xf32>
    %21 = vector.extract_strided_slice %20 {offsets = [0, 0], sizes = [16, 32], strides = [1, 1]} : vector<16x64xf32> to vector<16x32xf32>
    %cst_9 = arith.constant dense<0.000000e+00> : vector<1x16xf32>
    %22 = tpu.matmul %19, %21, %cst_9 {dimension_numbers = #tpu.dot_dimension_numbers<[1], [1], [0], [0], [0, 0, 1, 0], [], []>} : vector<1x32xf32>, vector<16x32xf32>, vector<1x16xf32> -> vector<1x16xf32>
    %23 = vector.extract_strided_slice %20 {offsets = [0, 32], sizes = [16, 32], strides = [1, 1]} : vector<16x64xf32> to vector<16x32xf32>
    %cst_10 = arith.constant dense<0.000000e+00> : vector<1x16xf32>
    %24 = tpu.matmul %19, %23, %cst_10 {dimension_numbers = #tpu.dot_dimension_numbers<[1], [1], [0], [0], [0, 0, 1, 0], [], []>} : vector<1x32xf32>, vector<16x32xf32>, vector<1x16xf32> -> vector<1x16xf32>
    %25 = tpu.concatenate %22, %24 in 0 : vector<1x16xf32>, vector<1x16xf32> -> vector<2x16xf32>
    %c0_11 = arith.constant 0 : index
    %26 = memref.load %arg3[%c0_11] : memref<1xf32, #tpu.memory_space<smem>>
    %cst_12 = arith.constant 2.000000e+00 : f32
    %27 = arith.mulf %cst_12, %26 : f32
    %28 = vector.broadcast %27 : f32 to vector<2x16xf32>
    %29 = arith.addf %25, %28 : vector<2x16xf32>
    %c0_13 = arith.constant 0 : index
    %c0_14 = arith.constant 0 : index
    %30 = vector.load %arg5[%c0_13, %c0_14] : memref<2x16xf32, #tpu.memory_space<vmem>>, vector<2x16xf32>
    tpu.vector_store %arg5[%c0_13, %c0_14], %29 {strides = array<i32>} : memref<2x16xf32, #tpu.memory_space<vmem>>, vector<2x16xf32>,
    return
  }
  func.func @transform_0(%arg0: i32) -> (i32, i32) {
    %c0_i32 = arith.constant 0 : i32
    %c0_i32_0 = arith.constant 0 : i32
    %c0_i32_1 = arith.constant 0 : i32
    return %c0_i32, %c0_i32_0 : i32, i32
  }
  func.func @transform_1(%arg0: i32) -> (i32, i32) {
    %c0_i32 = arith.constant 0 : i32
    %c0_i32_0 = arith.constant 0 : i32
    %c0_i32_1 = arith.constant 0 : i32
    return %c0_i32, %c0_i32_0 : i32, i32
  }
  func.func @transform_2(%arg0: i32) -> i32 {
    %c0_i32 = arith.constant 0 : i32
    %c0_i32_0 = arith.constant 0 : i32
    return %c0_i32 : i32
  }
  func.func @transform_3(%arg0: i32) -> (i32, i32) {
    %c0_i32 = arith.constant 0 : i32
    %c0_i32_0 = arith.constant 0 : i32
    return %arg0, %c0_i32 : i32, i32
  }
  func.func @transform_4(%arg0: i32) -> (i32, i32) {
    %c0_i32 = arith.constant 0 : i32
    %c0_i32_0 = arith.constant 0 : i32
    return %c0_i32, %arg0 : i32, i32
  }
}

module attributes {stable_mosaic.version = 11 : i64} {
  func.func @_fts_kernel(%arg0: i32, %arg1: memref<16x32xf32, #tpu.memory_space<vmem>>, %arg2: memref<16x32xf32, #tpu.memory_space<vmem>>, %arg3: memref<32x32xf32, #tpu.memory_space<vmem>>, %arg4: memref<16x64xf32, #tpu.memory_space<vmem>>) attributes {dimension_semantics = [#tpu.dimension_semantics<parallel>], iteration_bounds = array<i64: 1>, scalar_prefetch = 0 : i64, scratch_operands = 0 : i64, tpu.core_type = #tpu.core_type<tc>, window_params = [{transform_indices = @transform_0, window_bounds = array<i64: 16, 32>}, {transform_indices = @transform_1, window_bounds = array<i64: 16, 32>}, {pipeline_mode = #tpu.pipeline_mode<synchronous>, transform_indices = @transform_2, window_bounds = array<i64: 32, 32>}, {transform_indices = @transform_3, window_bounds = array<i64: 16, 64>}]} {
    %c0 = arith.constant 0 : index
    %c0_0 = arith.constant 0 : index
    %0 = vector.load %arg3[%c0, %c0_0] : memref<32x32xf32, #tpu.memory_space<vmem>>, vector<32x32xf32>
    %c0_1 = arith.constant 0 : index
    %c0_2 = arith.constant 0 : index
    %1 = vector.load %arg1[%c0_1, %c0_2] : memref<16x32xf32, #tpu.memory_space<vmem>>, vector<16x32xf32>
    %cst = arith.constant dense<0.000000e+00> : vector<16x32xf32>
    %2 = tpu.matmul %1, %0, %cst {dimension_numbers = #tpu.dot_dimension_numbers<[1], [0], [0], [1], [0, 0, 1, 1], [], []>} : vector<16x32xf32>, vector<32x32xf32>, vector<16x32xf32> -> vector<16x32xf32>
    %c0_3 = arith.constant 0 : index
    %c0_4 = arith.constant 0 : index
    %3 = vector.load %arg2[%c0_3, %c0_4] : memref<16x32xf32, #tpu.memory_space<vmem>>, vector<16x32xf32>
    %cst_5 = arith.constant dense<0.000000e+00> : vector<16x32xf32>
    %4 = tpu.matmul %3, %0, %cst_5 {dimension_numbers = #tpu.dot_dimension_numbers<[1], [0], [0], [1], [0, 0, 1, 1], [], []>} : vector<16x32xf32>, vector<32x32xf32>, vector<16x32xf32> -> vector<16x32xf32>
    %5 = tpu.concatenate %2, %4 in 1 : vector<16x32xf32>, vector<16x32xf32> -> vector<16x64xf32>
    %c0_6 = arith.constant 0 : index
    %c0_7 = arith.constant 0 : index
    %6 = vector.load %arg4[%c0_6, %c0_7] : memref<16x64xf32, #tpu.memory_space<vmem>>, vector<16x64xf32>
    tpu.vector_store %arg4[%c0_6, %c0_7], %5 {strides = array<i32>} : memref<16x64xf32, #tpu.memory_space<vmem>>, vector<16x64xf32>,
    return
  }
  func.func @transform_0(%arg0: i32) -> (i32, i32) {
    %c0_i32 = arith.constant 0 : i32
    %c0_i32_0 = arith.constant 0 : i32
    return %arg0, %c0_i32 : i32, i32
  }
  func.func @transform_1(%arg0: i32) -> (i32, i32) {
    %c0_i32 = arith.constant 0 : i32
    %c0_i32_0 = arith.constant 0 : i32
    return %arg0, %c0_i32 : i32, i32
  }
  func.func @transform_2(%arg0: i32) -> (i32, i32) {
    %c0_i32 = arith.constant 0 : i32
    %c0_i32_0 = arith.constant 0 : i32
    %c0_i32_1 = arith.constant 0 : i32
    return %c0_i32, %c0_i32_0 : i32, i32
  }
  func.func @transform_3(%arg0: i32) -> (i32, i32) {
    %c0_i32 = arith.constant 0 : i32
    %c0_i32_0 = arith.constant 0 : i32
    return %arg0, %c0_i32 : i32, i32
  }
}

</mosaic_0001>

<llo_original>
// kernel: dgi_forward.5
$region0: #{dgi_forward.5}
  #allocation0 [shape = 'u32[]', space=smem, size = 0x4, offset = 0x4, fixed_abs, tag = 'smem constant byte address 0x4 - core index']
  #allocation1 [shape = 'u32[72,128]{1,0:T(1,128)}', space=vmem, size = 0x9000, scoped, tag = 'internal scratch']
  #allocation2 [shape = 'f32[1]{0:T(128)S(6)}', space=smem, size = 0x200, scoped, tag = 'scoped memory for dgi_forward.5']
  %s0 = inlined_call_operand.vmem [shape: f32[1,64], index: 0, kind: input, shape index: {}]
  %s1 = inlined_call_operand.hbm [shape: f32[32,32], index: 1, kind: input, shape index: {}]
  %s2 = inlined_call_operand.<no memory space> [shape: f32[1], index: 2, kind: input, shape index: {}]
  %s3 = inlined_call_operand.vmem [shape: f32[16,64], index: 3, kind: input, shape index: {}]
  %s4 = inlined_call_operand.vmem [shape: f32[2,16], index: 4, kind: output, shape index: {}]
  %s5 = sld [smem:[#allocation0]]
  $region30: #{dgi_forward.5} parent=0
    _
  %s7 = ssub.s32 1, %s5
  %s8 = scalar_select 0, %s7, %s5
  %9 = sst [smem:[#allocation2]] %s2
  $region1: #{dgi_forward.5} parent=0
    #allocation3 [shape = 'u8[16384]{0}', space=vmem, size = 0x4000, scoped, tag = 'input window, operand 1, single buffered']
    #allocation4 [shape = 's32[1]{0}', space=sflag, size = 0x4, scoped, tag = 'scoped memory for dgi_forward.5']
    %10 = vsyncpa [#allocation4], 0
    // Predicated region
    $region2: #{dgi_forward.5} parent=1 // pred_check
      _
    $region3: #{dgi_forward.5} parent=1 // pred_check_branch
      %12 = sbr.rel (0) target = $region5
    $region4: #{dgi_forward.5} parent=1 // pred_region
      _
    $region5: #{dgi_forward.5} parent=1 // pred_fallthru
      _
    // Predicated region
    $region6: #{dgi_forward.5} parent=1 // pred_check
      _
    $region7: #{dgi_forward.5} parent=1 // pred_check_branch
      %14 = sbr.rel (0) target = $region9
    $region8: #{dgi_forward.5} parent=1 // pred_region
      %16 = vsyncadd [#allocation4], 0
      %s17 = sshll.u32 %s1, 4
      %s18 = int_to_ptr.hbm [resolvable:$true] %s17
      %s19 = sshll.u32 [#allocation3], 4
      %s20 = int_to_ptr.vmem [resolvable:$true] %s19
      %25 = dma.hbm_to_vmem [thread:$0]  %s18, 512, %s20, [#allocation4], 128, 128, 8
    $region9: #{dgi_forward.5} parent=1 // pred_fallthru
      _
    // Predicated region
    $region10: #{dgi_forward.5} parent=1 // pred_check
      _
    $region11: #{dgi_forward.5} parent=1 // pred_check_branch
      %27 = sbr.rel (0) target = $region13
    $region12: #{dgi_forward.5} parent=1 // pred_region
      _
    $region13: #{dgi_forward.5} parent=1 // pred_fallthru
      _
    // Predicated region
    $region14: #{dgi_forward.5} parent=1 // pred_check
      _
    $region15: #{dgi_forward.5} parent=1 // pred_check_branch
      %29 = sbr.rel (0) target = $region17
    $region16: #{dgi_forward.5} parent=1 // pred_region
      _
    $region17: #{dgi_forward.5} parent=1 // pred_fallthru
      _
    // Predicated region
    $region18: #{dgi_forward.5} parent=1 // pred_check
      _
    $region19: #{dgi_forward.5} parent=1 // pred_check_branch
      %31 = sbr.rel (0) target = $region21
    $region20: #{dgi_forward.5} parent=1 // pred_region
      %33 = dma.done [#allocation4], 512
    $region21: #{dgi_forward.5} parent=1 // pred_fallthru
      _
    %v34 = vld [vmem:[%s0] sm:$0x1]
    %v35 = vmul.f32 %v34, 0.0625
    %v36 = vxor.u32 %v35, 2147483648
    %v37 = vmul.f32 %v36, 1.442695
    %v38 = vpow.pop %v37
    %v39 = vadd.f32 %v38, 1.0
    %v40 = vrcp.pop %v39
    %v41 = vmul.f32 %v39, %v40
    %v42 = vsub.f32 1.0, %v41
    %v43 = vmul.f32 %v40, %v42
    %v44 = vadd.f32 %v40, %v43
    %vm45 = vweird.f32 %v39
    %vm46 = vweird.f32 %v40
    %vm47 = vmor %vm45, %vm46
    %v48 = vsel %vm47, %v40, %v44
    %v49 = vand.u32 2147483647, %v39
    %vm50 = vcmp.eq.f32.partialorder %v49, 8.507059e+37
    %v51 = vand.u32 %v39, 2147483648
    %v52 = vor.u32 1.1754944e-38, %v51
    %v53 = vsel %vm50, %v52, %v48
    %v54 = vmul.f32 1.0, %v53
    %56 = vrot.lane.b32.xlu0 %v54, 96
    %v57 = vpop.permute.xlu0 %56
    %v59 = vadd.f32 %v54, %v57
    %v60 = vld [vmem:[#allocation3] sm:$0xff]
    %v61 = vld [vmem:[#allocation3 + $0x8] sm:$0xff]
    %v62 = vld [vmem:[#allocation3 + $0x10] sm:$0xff]
    %v63 = vld [vmem:[#allocation3 + $0x18] sm:$0xff]
    %vm64 = vcmask 261120
    %v66 = vsel %vm64, %v59, 0
    %v69 = vsel %vm64, %v60, 0
    %v72 = vsel %vm64, %v61, 0
    %v75 = vsel %vm64, %v62, 0
    %v78 = vsel %vm64, %v63, 0
    %80 = vmatpush.xpose.msra.mxu0 0.0
    %81 = vmatpush.xpose.msra.mxu0 0.0
    %82 = vmatpush.xpose.msra.mxu0 0.0
    %83 = vmatpush.xpose.msra.mxu0 0.0
    %84 = vmatpush.xpose.msra.mxu0 0.0
    %85 = vmatpush.xpose.msra.mxu0 0.0
    %86 = vmatpush.xpose.msra.mxu0 0.0
    %87 = vmatpush.xpose.msra.mxu0 0.0
    %88 = vmatpush.xpose.msra.mxu0 0.0
    %89 = vmatpush.xpose.msra.mxu0 0.0
    %90 = vmatpush.xpose.msra.mxu0 0.0
    %91 = vmatpush.xpose.msra.mxu0 0.0
    %92 = vmatpush.xpose.msra.mxu0 %v78
    %93 = vmatpush.xpose.msra.mxu0 %v75
    %94 = vmatpush.xpose.msra.mxu0 %v72
    %95 = vmatpush.xpose.msra.mxu0 %v69
    %96 = vmatmul.f32.gmra.mxu0 %v66
    %v97 = vpop.f32.mrf.mxu0
    %v98 = vadd.f32 0.0, %v97
    %99 = vdwg.mxu0
    %v100 = vld [vmem:[%s3] sm:$0xff]
    %v101 = vld [vmem:[%s3 + $0x8] sm:$0xff]
    %v103 = vsel %vm64, %v98, 0
    %v106 = vsel %vm64, %v100, 0
    %v109 = vsel %vm64, %v101, 0
    %111 = vmatpush.xpose.msra.mxu0 0.0
    %112 = vmatpush.xpose.msra.mxu0 0.0
    %113 = vmatpush.xpose.msra.mxu0 0.0
    %114 = vmatpush.xpose.msra.mxu0 0.0
    %115 = vmatpush.xpose.msra.mxu0 0.0
    %116 = vmatpush.xpose.msra.mxu0 0.0
    %117 = vmatpush.xpose.msra.mxu0 0.0
    %118 = vmatpush.xpose.msra.mxu0 0.0
    %119 = vmatpush.xpose.msra.mxu0 0.0
    %120 = vmatpush.xpose.msra.mxu0 0.0
    %121 = vmatpush.xpose.msra.mxu0 0.0
    %122 = vmatpush.xpose.msra.mxu0 0.0
    %123 = vmatpush.xpose.msra.mxu0 0.0
    %124 = vmatpush.xpose.msra.mxu0 0.0
    %125 = vmatpush.xpose.msra.mxu0 %v109
    %126 = vmatpush.xpose.msra.mxu0 %v106
    %127 = vmatmul.f32.gmra.mxu0 %v103
    %v128 = vpop.f32.mrf.mxu0
    %v129 = vadd.f32 0.0, %v128
    %130 = vdwg.mxu0
    %131 = vrot.lane.b32.xlu0 %v100, 96
    %v132 = vpop.permute.xlu0 %131
    %133 = vrot.lane.b32.xlu0 %v101, 96
    %v134 = vpop.permute.xlu0 %133
    %v135 = vsel %vm64, %v132, 0
    %v137 = vsel %vm64, %v134, 0
    %139 = vmatpush.xpose.msra.mxu0 0.0
    %140 = vmatpush.xpose.msra.mxu0 0.0
    %141 = vmatpush.xpose.msra.mxu0 0.0
    %142 = vmatpush.xpose.msra.mxu0 0.0
    %143 = vmatpush.xpose.msra.mxu0 0.0
    %144 = vmatpush.xpose.msra.mxu0 0.0
    %145 = vmatpush.xpose.msra.mxu0 0.0
    %146 = vmatpush.xpose.msra.mxu0 0.0
    %147 = vmatpush.xpose.msra.mxu0 0.0
    %148 = vmatpush.xpose.msra.mxu0 0.0
    %149 = vmatpush.xpose.msra.mxu0 0.0
    %150 = vmatpush.xpose.msra.mxu0 0.0
    %151 = vmatpush.xpose.msra.mxu0 0.0
    %152 = vmatpush.xpose.msra.mxu0 0.0
    %153 = vmatpush.xpose.msra.mxu0 %v137
    %154 = vmatpush.xpose.msra.mxu0 %v135
    %155 = vmatmul.f32.gmra.mxu0 %v103
    %v156 = vpop.f32.mrf.mxu0
    %v157 = vadd.f32 0.0, %v156
    %158 = vdwg.mxu0
    %v160 = vrot.slane %v157, 7
    %vm162 = vcmask 1040384
    %v163 = vsel %vm162, %v129, %v160
    %s164 = sld [smem:[#allocation2]]
    %s165 = smul.f32 %s164, 2.0
    %v166 = vstv %s165
    %v167 = vadd.f32 %v163, %v166
    %vm168 = vcmask 123904
    %169 = vst.msk [vmem:[%s4] sm:$0x3] %vm168, %v167
    // Predicated region
    $region22: #{dgi_forward.5} parent=1 // pred_check
      _
    $region23: #{dgi_forward.5} parent=1 // pred_check_branch
      %171 = sbr.rel (0) target = $region25
    $region24: #{dgi_forward.5} parent=1 // pred_region
      _
    $region25: #{dgi_forward.5} parent=1 // pred_fallthru
      _
    // Predicated region
    $region26: #{dgi_forward.5} parent=1 // pred_check
      _
    $region27: #{dgi_forward.5} parent=1 // pred_check_branch
      %173 = sbr.rel (0) target = $region29
    $region28: #{dgi_forward.5} parent=1 // pred_region
      _
    $region29: #{dgi_forward.5} parent=1 // pred_fallthru
      _
    %174 = vsyncpa [#allocation4], 1

// kernel: dgi_forward.3
$region0: #{dgi_forward.3}
  #allocation0 [shape = 'u32[]', space=smem, size = 0x4, offset = 0x4, fixed_abs, tag = 'smem constant byte address 0x4 - core index']
  #allocation1 [shape = 'u32[72,128]{1,0:T(1,128)}', space=vmem, size = 0x9000, scoped, tag = 'internal scratch']
  %s0 = inlined_call_operand.hbm [shape: f32[16,32], index: 0, kind: input, shape index: {}]
  %s1 = inlined_call_operand.hbm [shape: f32[16,32], index: 1, kind: input, shape index: {}]
  %s2 = inlined_call_operand.hbm [shape: f32[32,32], index: 2, kind: input, shape index: {}]
  %s3 = inlined_call_operand.vmem [shape: f32[16,64], index: 3, kind: output, shape index: {}]
  %s4 = sld [smem:[#allocation0]]
  $region34: #{dgi_forward.3} parent=0
    _
  %s6 = ssub.s32 1, %s4
  %s7 = scalar_select 0, %s6, %s4
  $region1: #{dgi_forward.3} parent=0
    #allocation2 [shape = 'u8[8192]{0}', space=vmem, size = 0x2000, scoped, tag = 'input window, operand 0, single buffered']
    #allocation3 [shape = 's32[1]{0}', space=sflag, size = 0x4, scoped, tag = 'scoped memory for dgi_forward.3']
    #allocation4 [shape = 'u8[8192]{0}', space=vmem, size = 0x2000, scoped, tag = 'input window, operand 1, single buffered']
    #allocation5 [shape = 's32[1]{0}', space=sflag, size = 0x4, scoped, tag = 'scoped memory for dgi_forward.3']
    #allocation6 [shape = 'u8[16384]{0}', space=vmem, size = 0x4000, scoped, tag = 'input window, operand 2, single buffered']
    %8 = vsyncpa [#allocation3], 0
    %9 = vsyncpa [#allocation5], 0
    // Predicated region
    $region2: #{dgi_forward.3} parent=1 // pred_check
      _
    $region3: #{dgi_forward.3} parent=1 // pred_check_branch
      %11 = sbr.rel (0) target = $region5
    $region4: #{dgi_forward.3} parent=1 // pred_region
      %13 = vsyncadd [#allocation3], 0
      %s14 = sshll.u32 %s0, 4
      %s15 = int_to_ptr.hbm [resolvable:$true] %s14
      %s16 = sshll.u32 [#allocation2], 4
      %s17 = int_to_ptr.vmem [resolvable:$true] %s16
      %22 = dma.hbm_to_vmem [thread:$0]  %s15, 256, %s17, [#allocation3], 128, 128, 8
    $region5: #{dgi_forward.3} parent=1 // pred_fallthru
      _
    // Predicated region
    $region6: #{dgi_forward.3} parent=1 // pred_check
      _
    $region7: #{dgi_forward.3} parent=1 // pred_check_branch
      %24 = sbr.rel (0) target = $region9
    $region8: #{dgi_forward.3} parent=1 // pred_region
      %26 = vsyncadd [#allocation5], 0
      %s27 = sshll.u32 %s1, 4
      %s28 = int_to_ptr.hbm [resolvable:$true] %s27
      %s29 = sshll.u32 [#allocation4], 4
      %s30 = int_to_ptr.vmem [resolvable:$true] %s29
      %35 = dma.hbm_to_vmem [thread:$0]  %s28, 256, %s30, [#allocation5], 128, 128, 8
    $region9: #{dgi_forward.3} parent=1 // pred_fallthru
      _
    // Predicated region
    $region10: #{dgi_forward.3} parent=1 // pred_check
      _
    $region11: #{dgi_forward.3} parent=1 // pred_check_branch
      %37 = sbr.rel (0) target = $region13
    $region12: #{dgi_forward.3} parent=1 // pred_region
      %39 = vsyncadd [#allocation5], 0
      %s40 = sshll.u32 %s2, 4
      %s41 = int_to_ptr.hbm [resolvable:$true] %s40
      %s42 = sshll.u32 [#allocation6], 4
      %s43 = int_to_ptr.vmem [resolvable:$true] %s42
      %48 = dma.hbm_to_vmem [thread:$0]  %s41, 512, %s43, [#allocation5], 128, 128, 8
    $region13: #{dgi_forward.3} parent=1 // pred_fallthru
      _
    // Predicated region
    $region14: #{dgi_forward.3} parent=1 // pred_check
      _
    $region15: #{dgi_forward.3} parent=1 // pred_check_branch
      %50 = sbr.rel (0) target = $region17
    $region16: #{dgi_forward.3} parent=1 // pred_region
      %52 = dma.done [#allocation3], 256
    $region17: #{dgi_forward.3} parent=1 // pred_fallthru
      _
    // Predicated region
    $region18: #{dgi_forward.3} parent=1 // pred_check
      _
    $region19: #{dgi_forward.3} parent=1 // pred_check_branch
      %54 = sbr.rel (0) target = $region21
    $region20: #{dgi_forward.3} parent=1 // pred_region
      %56 = dma.done [#allocation5], 256
    $region21: #{dgi_forward.3} parent=1 // pred_fallthru
      _
    // Predicated region
    $region22: #{dgi_forward.3} parent=1 // pred_check
      _
    $region23: #{dgi_forward.3} parent=1 // pred_check_branch
      %58 = sbr.rel (0) target = $region25
    $region24: #{dgi_forward.3} parent=1 // pred_region
      %60 = dma.done [#allocation5], 512
    $region25: #{dgi_forward.3} parent=1 // pred_fallthru
      _
    %v61 = vld [vmem:[#allocation6] sm:$0xff]
    %v62 = vld [vmem:[#allocation6 + $0x8] sm:$0xff]
    %v63 = vld [vmem:[#allocation6 + $0x10] sm:$0xff]
    %v64 = vld [vmem:[#allocation6 + $0x18] sm:$0xff]
    %v65 = vld [vmem:[#allocation2] sm:$0xff]
    %v66 = vld [vmem:[#allocation2 + $0x8] sm:$0xff]
    %vm67 = vcmask 261120
    %v69 = vsel %vm67, %v65, 0
    %v72 = vsel %vm67, %v66, 0
    %74 = vmatpush.msra.mxu0 0.0
    %75 = vmatpush.msra.mxu0 0.0
    %76 = vmatpush.msra.mxu0 0.0
    %77 = vmatpush.msra.mxu0 0.0
    %78 = vmatpush.msra.mxu0 0.0
    %79 = vmatpush.msra.mxu0 0.0
    %80 = vmatpush.msra.mxu0 0.0
    %81 = vmatpush.msra.mxu0 0.0
    %82 = vmatpush.msra.mxu0 0.0
    %83 = vmatpush.msra.mxu0 0.0
    %84 = vmatpush.msra.mxu0 0.0
    %85 = vmatpush.msra.mxu0 0.0
    %86 = vmatpush.msra.mxu0 %v64
    %87 = vmatpush.msra.mxu0 %v63
    %88 = vmatpush.msra.mxu0 %v62
    %89 = vmatpush.msra.mxu0 %v61
    %90 = vmatmul.f32.gmra.mxu0 %v69
    %v91 = vpop.f32.mrf.mxu0
    %v92 = vadd.f32 0.0, %v91
    %93 = vmatmul.f32.gmra.mxu0 %v72
    %v94 = vpop.f32.mrf.mxu0
    %v95 = vadd.f32 0.0, %v94
    %96 = vdwg.mxu0
    %v97 = vld [vmem:[#allocation4] sm:$0xff]
    %v98 = vld [vmem:[#allocation4 + $0x8] sm:$0xff]
    %v100 = vsel %vm67, %v97, 0
    %v103 = vsel %vm67, %v98, 0
    %105 = vmatpush.msra.mxu0 0.0
    %106 = vmatpush.msra.mxu0 0.0
    %107 = vmatpush.msra.mxu0 0.0
    %108 = vmatpush.msra.mxu0 0.0
    %109 = vmatpush.msra.mxu0 0.0
    %110 = vmatpush.msra.mxu0 0.0
    %111 = vmatpush.msra.mxu0 0.0
    %112 = vmatpush.msra.mxu0 0.0
    %113 = vmatpush.msra.mxu0 0.0
    %114 = vmatpush.msra.mxu0 0.0
    %115 = vmatpush.msra.mxu0 0.0
    %116 = vmatpush.msra.mxu0 0.0
    %117 = vmatpush.msra.mxu0 %v64
    %118 = vmatpush.msra.mxu0 %v63
    %119 = vmatpush.msra.mxu0 %v62
    %120 = vmatpush.msra.mxu0 %v61
    %121 = vmatmul.f32.gmra.mxu0 %v100
    %v122 = vpop.f32.mrf.mxu0
    %v123 = vadd.f32 0.0, %v122
    %124 = vmatmul.f32.gmra.mxu0 %v103
    %v125 = vpop.f32.mrf.mxu0
    %v126 = vadd.f32 0.0, %v125
    %127 = vdwg.mxu0
    %130 = vrot.lane.b32.xlu0 %v123, 32
    %v131 = vpop.permute.xlu0 %130
    %132 = vrot.lane.b32.xlu0 %v126, 32
    %v133 = vpop.permute.xlu0 %132
    %v136 = vsel %vm67, %v92, %v131
    %v137 = vsel %vm67, %v95, %v133
    %vm138 = vcmask 523264
    %139 = vst.msk [vmem:[%s3] sm:$0xff] %vm138, %v136
    %140 = vst.msk [vmem:[%s3 + $0x8] sm:$0xff] %vm138, %v137
    // Predicated region
    $region26: #{dgi_forward.3} parent=1 // pred_check
      _
    $region27: #{dgi_forward.3} parent=1 // pred_check_branch
      %142 = sbr.rel (0) target = $region29
    $region28: #{dgi_forward.3} parent=1 // pred_region
      _
    $region29: #{dgi_forward.3} parent=1 // pred_fallthru
      _
    // Predicated region
    $region30: #{dgi_forward.3} parent=1 // pred_check
      _
    $region31: #{dgi_forward.3} parent=1 // pred_check_branch
      %144 = sbr.rel (0) target = $region33
    $region32: #{dgi_forward.3} parent=1 // pred_region
      _
    $region33: #{dgi_forward.3} parent=1 // pred_fallthru
      _
    %145 = vsyncpa [#allocation3], 1
    %146 = vsyncpa [#allocation5], 1

// kernel: dgi_forward.4
$region0: #{dgi_forward.4}
  #allocation0 [shape = 'u32[]', space=smem, size = 0x4, offset = 0x4, fixed_abs, tag = 'smem constant byte address 0x4 - core index']
  #allocation1 [shape = 'u32[72,128]{1,0:T(1,128)}', space=vmem, size = 0x9000, scoped, tag = 'internal scratch']
  #allocation2 [shape = 'f32[16,64]{1,0:T(8,128)}', space=vmem, size = 0x2000, scoped, tag = 'scratch operand']
  #allocation3 [shape = 'f32[16,32]{1,0:T(8,128)}', space=vmem, size = 0x2000, scoped, tag = 'scratch operand']
  #allocation4 [shape = 'f32[16,32]{1,0:T(8,128)}', space=vmem, size = 0x2000, scoped, tag = 'scratch operand']
  #allocation5 [shape = 'f32[1,64]{1,0:T(1,128)}', space=vmem, size = 0x200, scoped, tag = 'scratch operand']
  #allocation6 [shape = 'f32[1]{0:T(128)S(6)}', space=smem, size = 0x200, scoped, tag = 'scoped memory for dgi_forward.4']
  %s0 = inlined_call_operand.hbm [shape: f32[16,16], index: 0, kind: input, shape index: {}]
  %s1 = inlined_call_operand.hbm [shape: f32[16,16], index: 1, kind: input, shape index: {}]
  %s2 = inlined_call_operand.hbm [shape: f32[16,16], index: 2, kind: input, shape index: {}]
  %s3 = inlined_call_operand.vmem [shape: f32[16,64], index: 3, kind: input, shape index: {}]
  %s4 = inlined_call_operand.vmem [shape: f32[1,32], index: 4, kind: input, shape index: {}]
  %s5 = inlined_call_operand.<no memory space> [shape: f32[1], index: 5, kind: input, shape index: {}]
  %s6 = inlined_call_operand.vmem [shape: f32[16,64], index: 6, kind: output, shape index: {0}]
  %s7 = inlined_call_operand.vmem [shape: f32[1,64], index: 7, kind: output, shape index: {1}]
  %8 = xla_tuple %s6, %s7
  %s9 = sld [smem:[#allocation0]]
  $region70: #{dgi_forward.4} parent=0
    _
  %s11 = ssub.s32 1, %s9
  %s12 = scalar_select 0, %s11, %s9
  %13 = sst [smem:[#allocation6]] %s5
  $region1: #{dgi_forward.4} parent=0
    #allocation7 [shape = 'u8[8192]{0}', space=vmem, size = 0x2000, scoped, tag = 'input window, operand 0, single buffered']
    #allocation8 [shape = 's32[1]{0}', space=sflag, size = 0x4, scoped, tag = 'scoped memory for dgi_forward.4']
    #allocation9 [shape = 'u8[8192]{0}', space=vmem, size = 0x2000, scoped, tag = 'input window, operand 1, single buffered']
    #allocation10 [shape = 's32[1]{0}', space=sflag, size = 0x4, scoped, tag = 'scoped memory for dgi_forward.4']
    #allocation11 [shape = 'u8[8192]{0}', space=vmem, size = 0x2000, scoped, tag = 'input window, operand 2, single buffered']
    %14 = vsyncpa [#allocation8], 0
    %15 = vsyncpa [#allocation10], 0
    // Predicated region
    $region2: #{dgi_forward.4} parent=1 // pred_check
      _
    $region3: #{dgi_forward.4} parent=1 // pred_check_branch
      %17 = sbr.rel (0) target = $region5
    $region4: #{dgi_forward.4} parent=1 // pred_region
      %19 = vsyncadd [#allocation8], 0
      %s20 = sshll.u32 %s0, 4
      %s21 = int_to_ptr.hbm [resolvable:$true] %s20
      %s22 = sshll.u32 [#allocation7], 4
      %s23 = int_to_ptr.vmem [resolvable:$true] %s22
      %28 = dma.hbm_to_vmem [thread:$0]  %s21, 256, %s23, [#allocation8], 128, 128, 8
    $region5: #{dgi_forward.4} parent=1 // pred_fallthru
      _
    // Predicated region
    $region6: #{dgi_forward.4} parent=1 // pred_check
      _
    $region7: #{dgi_forward.4} parent=1 // pred_check_branch
      %30 = sbr.rel (0) target = $region9
    $region8: #{dgi_forward.4} parent=1 // pred_region
      %32 = vsyncadd [#allocation10], 0
      %s33 = sshll.u32 %s1, 4
      %s34 = int_to_ptr.hbm [resolvable:$true] %s33
      %s35 = sshll.u32 [#allocation9], 4
      %s36 = int_to_ptr.vmem [resolvable:$true] %s35
      %41 = dma.hbm_to_vmem [thread:$0]  %s34, 256, %s36, [#allocation10], 128, 128, 8
    $region9: #{dgi_forward.4} parent=1 // pred_fallthru
      _
    // Predicated region
    $region10: #{dgi_forward.4} parent=1 // pred_check
      _
    $region11: #{dgi_forward.4} parent=1 // pred_check_branch
      %43 = sbr.rel (0) target = $region13
    $region12: #{dgi_forward.4} parent=1 // pred_region
      %45 = vsyncadd [#allocation10], 0
      %s46 = sshll.u32 %s2, 4
      %s47 = int_to_ptr.hbm [resolvable:$true] %s46
      %s48 = sshll.u32 [#allocation11], 4
      %s49 = int_to_ptr.vmem [resolvable:$true] %s48
      %54 = dma.hbm_to_vmem [thread:$0]  %s47, 256, %s49, [#allocation10], 128, 128, 8
    $region13: #{dgi_forward.4} parent=1 // pred_fallthru
      _
    // Predicated region
    $region14: #{dgi_forward.4} parent=1 // pred_check
      _
    $region15: #{dgi_forward.4} parent=1 // pred_check_branch
      %56 = sbr.rel (0) target = $region17
    $region16: #{dgi_forward.4} parent=1 // pred_region
      _
    $region17: #{dgi_forward.4} parent=1 // pred_fallthru
      _
    // Predicated region
    $region18: #{dgi_forward.4} parent=1 // pred_check
      _
    $region19: #{dgi_forward.4} parent=1 // pred_check_branch
      %58 = sbr.rel (0) target = $region21
    $region20: #{dgi_forward.4} parent=1 // pred_region
      _
    $region21: #{dgi_forward.4} parent=1 // pred_fallthru
      _
    // Predicated region
    $region22: #{dgi_forward.4} parent=1 // pred_check
      _
    $region23: #{dgi_forward.4} parent=1 // pred_check_branch
      %60 = sbr.rel (0) target = $region25
    $region24: #{dgi_forward.4} parent=1 // pred_region
      _
    $region25: #{dgi_forward.4} parent=1 // pred_fallthru
      _
    // Predicated region
    $region26: #{dgi_forward.4} parent=1 // pred_check
      _
    $region27: #{dgi_forward.4} parent=1 // pred_check_branch
      %62 = sbr.rel (0) target = $region29
    $region28: #{dgi_forward.4} parent=1 // pred_region
      %64 = dma.done [#allocation8], 256
    $region29: #{dgi_forward.4} parent=1 // pred_fallthru
      _
    // Predicated region
    $region30: #{dgi_forward.4} parent=1 // pred_check
      _
    $region31: #{dgi_forward.4} parent=1 // pred_check_branch
      %66 = sbr.rel (0) target = $region33
    $region32: #{dgi_forward.4} parent=1 // pred_region
      %68 = dma.done [#allocation10], 256
    $region33: #{dgi_forward.4} parent=1 // pred_fallthru
      _
    // Predicated region
    $region34: #{dgi_forward.4} parent=1 // pred_check
      _
    $region35: #{dgi_forward.4} parent=1 // pred_check_branch
      %70 = sbr.rel (0) target = $region37
    $region36: #{dgi_forward.4} parent=1 // pred_region
      %72 = dma.done [#allocation10], 256
    $region37: #{dgi_forward.4} parent=1 // pred_fallthru
      _
    %p73 = scmp.eq.s32.totalorder 0, 0
    // Predicated region
    $region38: #{dgi_forward.4} parent=1 // pred_check
      %p74 = pneg %p73
    $region39: #{dgi_forward.4} parent=1 // pred_check_branch
      %76 = sbr.rel (%p74) target = $region41
    $region40: #{dgi_forward.4} parent=1 // pred_region
      %vm77 = vcmask 523264
      %78 = vst.msk [vmem:[#allocation2] sm:$0xff] %vm77, 0.0
      %79 = vst.msk [vmem:[#allocation2 + $0x8] sm:$0xff] %vm77, 0.0
      %vm80 = vcmask 261120
      %81 = vst.msk [vmem:[#allocation3] sm:$0xff] %vm80, 0.0
      %82 = vst.msk [vmem:[#allocation3 + $0x8] sm:$0xff] %vm80, 0.0
      %83 = vst.msk [vmem:[#allocation4] sm:$0xff] %vm80, 0.0
      %84 = vst.msk [vmem:[#allocation4 + $0x8] sm:$0xff] %vm80, 0.0
    $region41: #{dgi_forward.4} parent=1 // pred_fallthru
      _
    %p85 = scmp.eq.s32.totalorder 0, 0
    %p86 = pnand %p85, %p73
    %p87 = pneg %p86
    // Predicated region
    $region42: #{dgi_forward.4} parent=1 // pred_check
      _
    $region43: #{dgi_forward.4} parent=1 // pred_check_branch
      %89 = sbr.rel (%p86) target = $region45
    $region44: #{dgi_forward.4} parent=1 // pred_region
      %vm90 = vcmask 516096
      %91 = vst.msk [vmem:[#allocation5] sm:$0x1] %vm90, 0.0
    $region45: #{dgi_forward.4} parent=1 // pred_fallthru
      _
    %v92 = vld [vmem:[%s3] sm:$0xff]
    %v93 = vld [vmem:[%s3 + $0x8] sm:$0xff]
    %v94 = vld [vmem:[#allocation2] sm:$0xff]
    %v95 = vld [vmem:[#allocation2 + $0x8] sm:$0xff]
    %v96 = vld [vmem:[#allocation7] sm:$0xff]
    %v97 = vld [vmem:[#allocation7 + $0x8] sm:$0xff]
    %vm98 = vcmask 130048
    %v100 = vsel %vm98, %v96, 0
    %v103 = vsel %vm98, %v97, 0
    %105 = vmatpush.msra.mxu0 0.0
    %106 = vmatpush.msra.mxu0 0.0
    %107 = vmatpush.msra.mxu0 0.0
    %108 = vmatpush.msra.mxu0 0.0
    %109 = vmatpush.msra.mxu0 0.0
    %110 = vmatpush.msra.mxu0 0.0
    %111 = vmatpush.msra.mxu0 0.0
    %112 = vmatpush.msra.mxu0 0.0
    %113 = vmatpush.msra.mxu0 0.0
    %114 = vmatpush.msra.mxu0 0.0
    %115 = vmatpush.msra.mxu0 0.0
    %116 = vmatpush.msra.mxu0 0.0
    %117 = vmatpush.msra.mxu0 0.0
    %118 = vmatpush.msra.mxu0 0.0
    %119 = vmatpush.msra.mxu0 %v93
    %120 = vmatpush.msra.mxu0 %v92
    %121 = vmatmul.f32.gmra.mxu0 %v100
    %v122 = vpop.f32.mrf.mxu0
    %v123 = vadd.f32 0.0, %v122
    %124 = vmatmul.f32.gmra.mxu0 %v103
    %v125 = vpop.f32.mrf.mxu0
    %v126 = vadd.f32 0.0, %v125
    %127 = vdwg.mxu0
    %v128 = vadd.f32 %v94, %v123
    %v129 = vadd.f32 %v95, %v126
    %vm130 = vcmask 523264
    %131 = vst.msk [vmem:[#allocation2] sm:$0xff] %vm130, %v128
    %132 = vst.msk [vmem:[#allocation2 + $0x8] sm:$0xff] %vm130, %v129
    %v133 = vld [vmem:[#allocation3] sm:$0xff]
    %v134 = vld [vmem:[#allocation3 + $0x8] sm:$0xff]
    %v135 = vld [vmem:[#allocation9] sm:$0xff]
    %v136 = vld [vmem:[#allocation9 + $0x8] sm:$0xff]
    %v138 = vsel %vm98, %v135, 0
    %v141 = vsel %vm98, %v136, 0
    %143 = vmatpush.msra.mxu0 0.0
    %144 = vmatpush.msra.mxu0 0.0
    %145 = vmatpush.msra.mxu0 0.0
    %146 = vmatpush.msra.mxu0 0.0
    %147 = vmatpush.msra.mxu0 0.0
    %148 = vmatpush.msra.mxu0 0.0
    %149 = vmatpush.msra.mxu0 0.0
    %150 = vmatpush.msra.mxu0 0.0
    %151 = vmatpush.msra.mxu0 0.0
    %152 = vmatpush.msra.mxu0 0.0
    %153 = vmatpush.msra.mxu0 0.0
    %154 = vmatpush.msra.mxu0 0.0
    %155 = vmatpush.msra.mxu0 0.0
    %156 = vmatpush.msra.mxu0 0.0
    %157 = vmatpush.msra.mxu0 %v93
    %158 = vmatpush.msra.mxu0 %v92
    %159 = vmatmul.f32.gmra.mxu0 %v138
    %v160 = vpop.f32.mrf.mxu0
    %v161 = vadd.f32 0.0, %v160
    %162 = vmatmul.f32.gmra.mxu0 %v141
    %v163 = vpop.f32.mrf.mxu0
    %v164 = vadd.f32 0.0, %v163
    %165 = vdwg.mxu0
    %v166 = vadd.f32 %v133, %v161
    %v167 = vadd.f32 %v134, %v164
    %vm168 = vcmask 261120
    %169 = vst.msk [vmem:[#allocation3] sm:$0xff] %vm168, %v166
    %170 = vst.msk [vmem:[#allocation3 + $0x8] sm:$0xff] %vm168, %v167
    %v171 = vld [vmem:[#allocation4] sm:$0xff]
    %v172 = vld [vmem:[#allocation4 + $0x8] sm:$0xff]
    %v173 = vld [vmem:[#allocation11] sm:$0xff]
    %v174 = vld [vmem:[#allocation11 + $0x8] sm:$0xff]
    %v176 = vsel %vm98, %v173, 0
    %v179 = vsel %vm98, %v174, 0
    %181 = vmatpush.msra.mxu0 0.0
    %182 = vmatpush.msra.mxu0 0.0
    %183 = vmatpush.msra.mxu0 0.0
    %184 = vmatpush.msra.mxu0 0.0
    %185 = vmatpush.msra.mxu0 0.0
    %186 = vmatpush.msra.mxu0 0.0
    %187 = vmatpush.msra.mxu0 0.0
    %188 = vmatpush.msra.mxu0 0.0
    %189 = vmatpush.msra.mxu0 0.0
    %190 = vmatpush.msra.mxu0 0.0
    %191 = vmatpush.msra.mxu0 0.0
    %192 = vmatpush.msra.mxu0 0.0
    %193 = vmatpush.msra.mxu0 0.0
    %194 = vmatpush.msra.mxu0 0.0
    %195 = vmatpush.msra.mxu0 %v93
    %196 = vmatpush.msra.mxu0 %v92
    %197 = vmatmul.f32.gmra.mxu0 %v176
    %v198 = vpop.f32.mrf.mxu0
    %v199 = vadd.f32 0.0, %v198
    %200 = vmatmul.f32.gmra.mxu0 %v179
    %v201 = vpop.f32.mrf.mxu0
    %v202 = vadd.f32 0.0, %v201
    %203 = vdwg.mxu0
    %v204 = vadd.f32 %v171, %v199
    %v205 = vadd.f32 %v172, %v202
    %206 = vst.msk [vmem:[#allocation4] sm:$0xff] %vm168, %v204
    %207 = vst.msk [vmem:[#allocation4 + $0x8] sm:$0xff] %vm168, %v205
    // Predicated region
    $region46: #{dgi_forward.4} parent=1 // pred_check
      %p208 = pneg %p73
    $region47: #{dgi_forward.4} parent=1 // pred_check_branch
      %210 = sbr.rel (%p208) target = $region49
    $region48: #{dgi_forward.4} parent=1 // pred_region
      %v211 = vld [vmem:[%s4] sm:$0x1]
      %v213 = vperm.slane %v211, 0
      %214 = vrot.lane.b32.xlu0 %v213, 32
      %v215 = vpop.permute.xlu0 %214
      %v217 = vsel %vm168, %v211, %v215
      %s218 = sld [smem:[#allocation6]]
      %v219 = vld [vmem:[#allocation2] sm:$0xff]
      %v220 = vld [vmem:[#allocation2 + $0x8] sm:$0xff]
      %v221 = vperm.slane %v217, 0
      %v222 = vadd.f32 %v219, %v221
      %v223 = vadd.f32 %v220, %v221
      %vm224 = vcmp.gt.f32.partialorder %v222, 0.0
      %vm225 = vcmp.gt.f32.partialorder %v223, 0.0
      %v226 = vstv %s218
      %v227 = vmul.f32 %v226, %v222
      %v228 = vmul.f32 %v226, %v223
      %v229 = vsel %vm224, %v222, %v227
      %v230 = vsel %vm225, %v223, %v228
      %v231 = vld [vmem:[#allocation3] sm:$0xff]
      %v232 = vld [vmem:[#allocation3 + $0x8] sm:$0xff]
      %v234 = vadd.f32 %v231, %v213
      %v235 = vadd.f32 %v232, %v213
      %vm236 = vcmp.gt.f32.partialorder %v234, 0.0
      %vm237 = vcmp.gt.f32.partialorder %v235, 0.0
      %v238 = vmul.f32 %v226, %v234
      %v239 = vmul.f32 %v226, %v235
      %v240 = vsel %vm236, %v234, %v238
      %v241 = vsel %vm237, %v235, %v239
      %v242 = vld [vmem:[#allocation4] sm:$0xff]
      %v243 = vld [vmem:[#allocation4 + $0x8] sm:$0xff]
      %v244 = vadd.f32 %v242, %v213
      %v245 = vadd.f32 %v243, %v213
      %vm246 = vcmp.gt.f32.partialorder %v244, 0.0
      %vm247 = vcmp.gt.f32.partialorder %v245, 0.0
      %v248 = vmul.f32 %v226, %v244
      %v249 = vmul.f32 %v226, %v245
      %v250 = vsel %vm246, %v244, %v248
      %v251 = vsel %vm247, %v245, %v249
      %252 = vst.msk [vmem:[%s6] sm:$0xff] %vm130, %v229
      %253 = vst.msk [vmem:[%s6 + $0x8] sm:$0xff] %vm130, %v230
      %v254 = vld [vmem:[#allocation5] sm:$0x1]
      %v255 = vsel %vm168, %v240, 0.0
      %v256 = vsel %vm168, %v241, 0.0
      %v257 = vadd.f32 %v255, %v256
      %v258 = vrot.slane %v257, 4
      %v259 = vadd.f32 %v257, %v258
      %v260 = vrot.slane %v259, 2
      %v261 = vadd.f32 %v259, %v260
      %v262 = vrot.slane %v261, 1
      %v263 = vadd.f32 %v261, %v262
      %v264 = vsel %vm168, %v250, 0.0
      %v265 = vsel %vm168, %v251, 0.0
      %v266 = vadd.f32 %v264, %v265
      %v267 = vrot.slane %v266, 4
      %v268 = vadd.f32 %v266, %v267
      %v269 = vrot.slane %v268, 2
      %v270 = vadd.f32 %v268, %v269
      %v271 = vrot.slane %v270, 1
      %v272 = vadd.f32 %v270, %v271
      %274 = vrot.lane.b32.xlu0 %v272, 32
      %v275 = vpop.permute.xlu0 %274
      %v277 = vsel %vm168, %v263, %v275
      %v278 = vadd.f32 %v254, %v277
      %vm279 = vcmask 516096
      %280 = vst.msk [vmem:[#allocation5] sm:$0x1] %vm279, %v278
    $region49: #{dgi_forward.4} parent=1 // pred_fallthru
      _
    // Predicated region
    $region50: #{dgi_forward.4} parent=1 // pred_check
      _
    $region51: #{dgi_forward.4} parent=1 // pred_check_branch
      %282 = sbr.rel (%p86) target = $region53
    $region52: #{dgi_forward.4} parent=1 // pred_region
      %v283 = vld [vmem:[#allocation5] sm:$0x1]
      %vm284 = vcmask 516096
      %285 = vst.msk [vmem:[%s7] sm:$0x1] %vm284, %v283
    $region53: #{dgi_forward.4} parent=1 // pred_fallthru
      _
    // Predicated region
    $region54: #{dgi_forward.4} parent=1 // pred_check
      _
    $region55: #{dgi_forward.4} parent=1 // pred_check_branch
      %287 = sbr.rel (0) target = $region57
    $region56: #{dgi_forward.4} parent=1 // pred_region
      _
    $region57: #{dgi_forward.4} parent=1 // pred_fallthru
      _
    // Predicated region
    $region58: #{dgi_forward.4} parent=1 // pred_check
      _
    $region59: #{dgi_forward.4} parent=1 // pred_check_branch
      %289 = sbr.rel (0) target = $region61
    $region60: #{dgi_forward.4} parent=1 // pred_region
      _
    $region61: #{dgi_forward.4} parent=1 // pred_fallthru
      _
    // Predicated region
    $region62: #{dgi_forward.4} parent=1 // pred_check
      _
    $region63: #{dgi_forward.4} parent=1 // pred_check_branch
      %291 = sbr.rel (0) target = $region65
    $region64: #{dgi_forward.4} parent=1 // pred_region
      _
    $region65: #{dgi_forward.4} parent=1 // pred_fallthru
      _
    // Predicated region
    $region66: #{dgi_forward.4} parent=1 // pred_check
      _
    $region67: #{dgi_forward.4} parent=1 // pred_check_branch
      %293 = sbr.rel (0) target = $region69
    $region68: #{dgi_forward.4} parent=1 // pred_region
      _
    $region69: #{dgi_forward.4} parent=1 // pred_fallthru
      _
    %294 = vsyncpa [#allocation8], 1
    %295 = vsyncpa [#allocation10], 1

</llo_original>
